<compile_context>
chip_gen: v5e
topology: v5e:2x2
jax: 0.10.0
libtpu: 0.0.40
codegen_flags: <defaults>
</compile_context>

<pallas_src>
import jax
import jax.numpy as jnp
from jax import lax
from jax.experimental import pallas as pl
from jax.experimental.pallas import tpu as pltpu

NUM_CLASSES = 2
NEGPOS_RATIO = 7
# LossWeights defaults: localization=2, classification=1, landmarks=0, depths=0
DEFAULT_WEIGHTS = dict(localization=2.0, classification=1.0,
                       landmarks=0.0, depths=0.0)


def _masked_smooth_l1(pred, target, pos_mask):
    """Sum of smooth_l1 over (positive & non-NaN) elements + element count.

    pred/target are (B, K, P) lane-dense; pos_mask is (B, 1, P).
    Caller divides by max(count, 1), matching masked_loss() in the module.
    """
    valid = pos_mask & jnp.logical_not(jnp.isnan(target))
    t = jnp.where(valid, target, 0.0)
    p = jnp.where(valid, pred, 0.0)
    d = jnp.abs(p - t)
    per_elem = jnp.where(d < 1.0, 0.5 * d * d, d - 0.5)
    loss_sum = jnp.sum(jnp.where(valid, per_elem, 0.0))
    count = jnp.sum(valid.astype(jnp.float32))
    return loss_sum, count


def _make_kernel(B, P, C, with_lmk, with_dpt):
    """Build the kernel closure; zero-weighted branches are not even traced."""

    def kernel(*refs):
        idx = 0
        label_ref = refs[idx]; idx += 1
        boxes_pred_ref = refs[idx]; idx += 1
        boxes_t_ref = refs[idx]; idx += 1
        if with_lmk:
            kpts_pred_ref = refs[idx]; idx += 1
            kpts_t_ref = refs[idx]; idx += 1
        if with_dpt:
            dpth_pred_ref = refs[idx]; idx += 1
            dpth_t_ref = refs[idx]; idx += 1
        conf_ref = refs[idx]; idx += 1
        out_ref = refs[idx]

        label = label_ref[...]                     # (B, P) int32, lane-dense
        positive = label != 0                      # (B, P)
        posk = positive[:, None, :]                # (B, 1, P) -> broadcast over K

        # ---- localization loss (masked smooth L1 over positives, NaN-safe) ----
        loc_sum, loc_cnt = _masked_smooth_l1(
            boxes_pred_ref[...], boxes_t_ref[...], posk)
        out_ref[0] = loc_sum / jnp.maximum(loc_cnt, 1.0)

        # ---- landmark loss (skipped at trace time when weight == 0) ----
        if with_lmk:
            lmk_sum, lmk_cnt = _masked_smooth_l1(
                kpts_pred_ref[...], kpts_t_ref[...], posk)
            out_ref[2] = lmk_sum / jnp.maximum(lmk_cnt, 1.0)
        else:
            out_ref[2] = jnp.float32(0.0)

        # ---- depth loss (skipped at trace time when weight == 0) ----
        if with_dpt:
            dpt_sum, dpt_cnt = _masked_smooth_l1(
                dpth_pred_ref[...], dpth_t_ref[...], posk)
            out_ref[3] = dpt_sum / jnp.maximum(dpt_cnt, 1.0)
        else:
            out_ref[3] = jnp.float32(0.0)

        # ---- per-prior cross entropy, conf laid out (B, C, P) ----
        conf = conf_ref[...]
        if C == 2:
            c0 = conf[:, 0, :]                     # (B, P)
            c1 = conf[:, 1, :]                     # (B, P)
            mx = jnp.maximum(c0, c1)
            lse = mx + jnp.log(jnp.exp(c0 - mx) + jnp.exp(c1 - mx))
            picked = jnp.where(positive, c1, c0)
        else:
            mx = jnp.max(conf, axis=1, keepdims=True)
            lse = mx[:, 0, :] + jnp.log(jnp.sum(jnp.exp(conf - mx), axis=1))
            iota_c = lax.broadcasted_iota(jnp.int32, conf.shape, 1)
            picked = jnp.sum(
                jnp.where(iota_c == label[:, None, :], conf, 0.0), axis=1)
        ce = lse - picked                          # (B, P)

        # ---- hard negative mining (stable descending-sort rank) ----
        loss_c = jnp.where(positive, 0.0, ce)      # zero out positives, (B, P)
        # tie-break triangle computed once as a (P, P) bool, broadcast over batch
        iota_k = lax.broadcasted_iota(jnp.int32, (P, P), 0)   # axis1 = k
        iota_j = lax.broadcasted_iota(jnp.int32, (P, P), 1)   # axis2 = j
        tri = iota_k < iota_j                      # (P, P) bool
        loss_k = loss_c[:, :, None]                # (B, P_k, 1)
        loss_j = loss_c[:, None, :]                # (B, 1, P_j)
        # cmp[b, k, j] = "prior k sorts before prior j" (single fused bool)
        cmp = (loss_k > loss_j) | ((loss_k == loss_j) & tri[None, :, :])
        cmp_f = cmp.astype(jnp.float32)            # (B, P, P)

        # rank[b, j] = sum_k cmp[b, k, j]; reduce on the MXU (ones @ cmp),
        # output keeps the prior axis lane-dense.
        ones_lhs = jnp.ones((B, 8, P), jnp.float32)
        rank8 = jnp.einsum('bmk,bkj->bmj', ones_lhs, cmp_f,
                           preferred_element_type=jnp.float32)   # (B, 8, P)
        rank = rank8[:, 0, :]                      # (B, P) f32

        num_pos = jnp.sum(positive.astype(jnp.int32), axis=1, keepdims=True)
        num_neg = jnp.minimum(NEGPOS_RATIO * num_pos, P - 1).astype(jnp.float32)
        neg = rank < num_neg                       # (B, P)

        # ---- confidence loss ----
        combined = positive | neg
        conf_sum = jnp.sum(jnp.where(combined, ce, 0.0))
        n_pos_total = jnp.sum(num_pos).astype(jnp.float32)
        out_ref[1] = conf_sum / jnp.maximum(n_pos_total, 1.0)

    return kernel


def multibox_loss(label_t, boxes_pred, boxes_t, kpts_pred, kypts_t,
                  dpth_pred, dpths_t, conf_pred, *,
                  w_loc=DEFAULT_WEIGHTS["localization"],
                  w_cls=DEFAULT_WEIGHTS["classification"],
                  w_lmk=DEFAULT_WEIGHTS["landmarks"],
                  w_dpt=DEFAULT_WEIGHTS["depths"]):
    B, P = label_t.shape
    C = conf_pred.shape[-1]
    with_lmk = (w_lmk != 0.0)
    with_dpt = (w_dpt != 0.0)

    # Lane-dense relayout: put the prior axis (P=128) on the lane dimension.
    to_kp = lambda x: jnp.transpose(x, (0, 2, 1))   # (B, P, K) -> (B, K, P)

    inputs = [label_t.astype(jnp.int32), to_kp(boxes_pred), to_kp(boxes_t)]
    if with_lmk:
        inputs += [to_kp(kpts_pred), to_kp(kypts_t)]
    if with_dpt:
        inputs += [to_kp(dpth_pred), to_kp(dpths_t)]
    inputs += [to_kp(conf_pred)]

    vmem = pl.BlockSpec(memory_space=pltpu.MemorySpace.VMEM)
    # Toy B=2, P=128: everything fits in VMEM as a single block; no grid,
    # no dimension_semantics (launch/DMA-setup bound at this size anyway).
    losses = pl.pallas_call(
        _make_kernel(B, P, C, with_lmk, with_dpt),
        out_shape=jax.ShapeDtypeStruct((4,), jnp.float32),
        in_specs=[vmem] * len(inputs),
        out_specs=pl.BlockSpec(memory_space=pltpu.MemorySpace.SMEM),
    )(*inputs)

    loss_l, loss_c = losses[0], losses[1]
    loss_landm, loss_dpth = losses[2], losses[3]
    total = (w_loc * loss_l + w_cls * loss_c
             + w_lmk * loss_landm + w_dpt * loss_dpth)
    return {
        "loss": total,
        "boxes": w_loc * loss_l,
        "classes": w_cls * loss_c,
        "landmarks": w_lmk * loss_landm,
        "depths": w_dpt * loss_dpth,
    }


if __name__ == "__main__":
    B, P, C = 2, 128, NUM_CLASSES
    key = jax.random.PRNGKey(0)
    keys = jax.random.split(key, 9)

    # predictions (as produced by the SSD/RetinaFace head)
    boxes_pred = jax.random.normal(keys[0], (B, P, 4), jnp.float32)
    conf_pred = jax.random.normal(keys[1], (B, P, C), jnp.float32)
    kpts_pred = jax.random.normal(keys[2], (B, P, 10), jnp.float32)
    dpth_pred = jax.random.normal(keys[3], (B, P, 2), jnp.float32)

    # pre-encoded targets (output of match/encode/encl in the original code)
    label_t = (jax.random.uniform(keys[4], (B, P)) < 0.1).astype(jnp.int32)
    boxes_t = jax.random.normal(keys[5], (B, P, 4), jnp.float32)
    kypts_t = jax.random.normal(keys[6], (B, P, 10), jnp.float32)
    # some missing keypoints -> NaN (exercises masked_loss)
    nan_mask = jax.random.uniform(keys[7], (B, P, 10)) < 0.2
    kypts_t = jnp.where(nan_mask, jnp.nan, kypts_t)
    dpths_t = jax.random.normal(keys[8], (B, P, 2), jnp.float32)

    # Default LossWeights (landmarks=0, depths=0): those branches are not traced.
    out = multibox_loss(label_t, boxes_pred, boxes_t, kpts_pred, kypts_t,
                        dpth_pred, dpths_t, conf_pred)
    out = jax.tree_util.tree_map(jax.block_until_ready, out)

    # Non-zero landmark/depth weights: exercises the NaN-masked branches too.
    out_full = multibox_loss(label_t, boxes_pred, boxes_t, kpts_pred, kypts_t,
                             dpth_pred, dpths_t, conf_pred,
                             w_loc=2.0, w_cls=1.0, w_lmk=1.0, w_dpt=1.0)
    out_full = jax.tree_util.tree_map(jax.block_until_ready, out_full)

    print("KERNEL_OK")
</pallas_src>

<mosaic_0001>
module attributes {stable_mosaic.version = 11 : i64} {
  func.func @kernel(%arg0: memref<2x128xi32, #tpu.memory_space<vmem>>, %arg1: memref<2x4x128xf32, #tpu.memory_space<vmem>>, %arg2: memref<2x4x128xf32, #tpu.memory_space<vmem>>, %arg3: memref<2x2x128xf32, #tpu.memory_space<vmem>>, %arg4: memref<4xf32, #tpu.memory_space<smem>>) attributes {dimension_semantics = [], scalar_prefetch = 0 : i64, scratch_operands = 0 : i64, tpu.core_type = #tpu.core_type<tc>} {
    %c0 = arith.constant 0 : index
    %c0_0 = arith.constant 0 : index
    %0 = vector.load %arg0[%c0, %c0_0] : memref<2x128xi32, #tpu.memory_space<vmem>>, vector<2x128xi32>
    %c0_i32 = arith.constant 0 : i32
    %1 = vector.broadcast %c0_i32 : i32 to vector<2x128xi32>
    %2 = arith.cmpi ne, %0, %1 : vector<2x128xi32>
    %3 = vector.shape_cast %2 : vector<2x128xi1> to vector<2x1x128xi1>
    %c0_1 = arith.constant 0 : index
    %c0_2 = arith.constant 0 : index
    %c0_3 = arith.constant 0 : index
    %4 = vector.load %arg1[%c0_1, %c0_2, %c0_3] : memref<2x4x128xf32, #tpu.memory_space<vmem>>, vector<2x4x128xf32>
    %c0_4 = arith.constant 0 : index
    %c0_5 = arith.constant 0 : index
    %c0_6 = arith.constant 0 : index
    %5 = vector.load %arg2[%c0_4, %c0_5, %c0_6] : memref<2x4x128xf32, #tpu.memory_space<vmem>>, vector<2x4x128xf32>
    %6 = arith.cmpf one, %5, %5 : vector<2x4x128xf32>
    %cst = arith.constant dense<true> : vector<2x4x128xi1>
    %7 = arith.xori %6, %cst : vector<2x4x128xi1>
    %8 = vector.broadcast %3 : vector<2x1x128xi1> to vector<2x4x128xi1>
    %9 = arith.andi %8, %7 : vector<2x4x128xi1>
    %cst_7 = arith.constant 0.000000e+00 : f32
    %10 = vector.broadcast %cst_7 : f32 to vector<2x4x128xf32>
    %11 = arith.select %9, %5, %10 : vector<2x4x128xi1>, vector<2x4x128xf32>
    %cst_8 = arith.constant 0.000000e+00 : f32
    %12 = vector.broadcast %cst_8 : f32 to vector<2x4x128xf32>
    %13 = arith.select %9, %4, %12 : vector<2x4x128xi1>, vector<2x4x128xf32>
    %14 = arith.subf %13, %11 : vector<2x4x128xf32>
    %15 = math.absf %14 : vector<2x4x128xf32>
    %cst_9 = arith.constant 1.000000e+00 : f32
    %16 = vector.broadcast %cst_9 : f32 to vector<2x4x128xf32>
    %17 = arith.cmpf olt, %15, %16 : vector<2x4x128xf32>
    %cst_10 = arith.constant 5.000000e-01 : f32
    %18 = vector.broadcast %cst_10 : f32 to vector<2x4x128xf32>
    %19 = arith.mulf %18, %15 : vector<2x4x128xf32>
    %20 = arith.mulf %19, %15 : vector<2x4x128xf32>
    %cst_11 = arith.constant 5.000000e-01 : f32
    %21 = vector.broadcast %cst_11 : f32 to vector<2x4x128xf32>
    %22 = arith.subf %15, %21 : vector<2x4x128xf32>
    %23 = arith.select %17, %20, %22 : vector<2x4x128xi1>, vector<2x4x128xf32>
    %cst_12 = arith.constant 0.000000e+00 : f32
    %24 = vector.broadcast %cst_12 : f32 to vector<2x4x128xf32>
    %25 = arith.select %9, %23, %24 : vector<2x4x128xi1>, vector<2x4x128xf32>
    %26 = vector.shape_cast %25 : vector<2x4x128xf32> to vector<1x2x4x128xf32>
    %cst_13 = arith.constant dense<0.000000e+00> : vector<1xf32>
    %27 = vector.multi_reduction <add>, %26, %cst_13 [1, 2, 3] : vector<1x2x4x128xf32> to vector<1xf32>
    %28 = vector.shape_cast %27 : vector<1xf32> to vector<1x1x1x1xf32>
    %29 = vector.extract %28[0, 0, 0, 0] : f32 from vector<1x1x1x1xf32>
    %30 = arith.extui %9 : vector<2x4x128xi1> to vector<2x4x128xi32>
    %31 = arith.sitofp %30 : vector<2x4x128xi32> to vector<2x4x128xf32>
    %32 = vector.shape_cast %31 : vector<2x4x128xf32> to vector<1x2x4x128xf32>
    %cst_14 = arith.constant dense<0.000000e+00> : vector<1xf32>
    %33 = vector.multi_reduction <add>, %32, %cst_14 [1, 2, 3] : vector<1x2x4x128xf32> to vector<1xf32>
    %34 = vector.shape_cast %33 : vector<1xf32> to vector<1x1x1x1xf32>
    %35 = vector.extract %34[0, 0, 0, 0] : f32 from vector<1x1x1x1xf32>
    %cst_15 = arith.constant 1.000000e+00 : f32
    %36 = arith.maximumf %35, %cst_15 : f32
    %37 = arith.divf %29, %36 : f32
    %c0_16 = arith.constant 0 : index
    %38 = memref.load %arg4[%c0_16] : memref<4xf32, #tpu.memory_space<smem>>
    memref.store %37, %arg4[%c0_16] : memref<4xf32, #tpu.memory_space<smem>>
    %cst_17 = arith.constant 0.000000e+00 : f32
    %c2 = arith.constant 2 : index
    %39 = memref.load %arg4[%c2] : memref<4xf32, #tpu.memory_space<smem>>
    memref.store %cst_17, %arg4[%c2] : memref<4xf32, #tpu.memory_space<smem>>
    %cst_18 = arith.constant 0.000000e+00 : f32
    %c3 = arith.constant 3 : index
    %40 = memref.load %arg4[%c3] : memref<4xf32, #tpu.memory_space<smem>>
    memref.store %cst_18, %arg4[%c3] : memref<4xf32, #tpu.memory_space<smem>>
    %c0_19 = arith.constant 0 : index
    %c0_20 = arith.constant 0 : index
    %c0_21 = arith.constant 0 : index
    %41 = vector.load %arg3[%c0_19, %c0_20, %c0_21] : memref<2x2x128xf32, #tpu.memory_space<vmem>>, vector<2x2x128xf32>
    %42 = vector.extract_strided_slice %41 {offsets = [0, 0, 0], sizes = [2, 1, 128], strides = [1, 1, 1]} : vector<2x2x128xf32> to vector<2x1x128xf32>
    %43 = vector.shape_cast %42 : vector<2x1x128xf32> to vector<2x128xf32>
    %44 = vector.extract_strided_slice %41 {offsets = [0, 1, 0], sizes = [2, 1, 128], strides = [1, 1, 1]} : vector<2x2x128xf32> to vector<2x1x128xf32>
    %45 = vector.shape_cast %44 : vector<2x1x128xf32> to vector<2x128xf32>
    %46 = arith.maximumf %43, %45 : vector<2x128xf32>
    %47 = arith.subf %43, %46 : vector<2x128xf32>
    %48 = math.exp %47 : vector<2x128xf32>
    %49 = arith.subf %45, %46 : vector<2x128xf32>
    %50 = math.exp %49 : vector<2x128xf32>
    %51 = arith.addf %48, %50 : vector<2x128xf32>
    %52 = math.log %51 : vector<2x128xf32>
    %53 = arith.addf %46, %52 : vector<2x128xf32>
    %54 = arith.select %2, %45, %43 : vector<2x128xi1>, vector<2x128xf32>
    %55 = arith.subf %53, %54 : vector<2x128xf32>
    %cst_22 = arith.constant 0.000000e+00 : f32
    %56 = vector.broadcast %cst_22 : f32 to vector<2x128xf32>
    %57 = arith.select %2, %56, %55 : vector<2x128xi1>, vector<2x128xf32>
    %58 = tpu.iota {dimensions = array<i32: 0>} : vector<128x128xi32>
    %59 = tpu.iota {dimensions = array<i32: 1>} : vector<128x128xi32>
    %60 = arith.cmpi slt, %58, %59 : vector<128x128xi32>
    %61 = vector.shape_cast %57 : vector<2x128xf32> to vector<2x128x1xf32>
    %62 = vector.shape_cast %57 : vector<2x128xf32> to vector<2x1x128xf32>
    %63 = vector.broadcast %61 : vector<2x128x1xf32> to vector<2x128x128xf32>
    %64 = vector.broadcast %62 : vector<2x1x128xf32> to vector<2x128x128xf32>
    %65 = arith.cmpf ogt, %63, %64 : vector<2x128x128xf32>
    %66 = vector.broadcast %61 : vector<2x128x1xf32> to vector<2x128x128xf32>
    %67 = vector.broadcast %62 : vector<2x1x128xf32> to vector<2x128x128xf32>
    %68 = arith.cmpf oeq, %66, %67 : vector<2x128x128xf32>
    %69 = vector.shape_cast %60 : vector<128x128xi1> to vector<1x128x128xi1>
    %70 = vector.broadcast %69 : vector<1x128x128xi1> to vector<2x128x128xi1>
    %71 = arith.andi %68, %70 : vector<2x128x128xi1>
    %72 = arith.ori %65, %71 : vector<2x128x128xi1>
    %73 = arith.extui %72 : vector<2x128x128xi1> to vector<2x128x128xi32>
    %74 = arith.sitofp %73 : vector<2x128x128xi32> to vector<2x128x128xf32>
    %cst_23 = arith.constant 1.000000e+00 : f32
    %75 = vector.broadcast %cst_23 : f32 to vector<2x8x128xf32>
    "tpu.trace_start"() <{level = 10 : i32, message = "bmk,bkj->bmj"}> : () -> ()
    %cst_24 = arith.constant dense<0.000000e+00> : vector<2x8x128xf32>
    %76 = tpu.matmul %75, %74, %cst_24 {dimension_numbers = #tpu.dot_dimension_numbers<[2], [1], [1], [2], [0, 0, 0, 1, 1, 2], [0], [0]>} : vector<2x8x128xf32>, vector<2x128x128xf32>, vector<2x8x128xf32> -> vector<2x8x128xf32>
    "tpu.trace_stop"() : () -> ()
    %77 = vector.extract_strided_slice %76 {offsets = [0, 0, 0], sizes = [2, 1, 128], strides = [1, 1, 1]} : vector<2x8x128xf32> to vector<2x1x128xf32>
    %78 = vector.shape_cast %77 : vector<2x1x128xf32> to vector<2x128xf32>
    %79 = arith.extui %2 : vector<2x128xi1> to vector<2x128xi32>
    %cst_25 = arith.constant dense<0> : vector<2xi32>
    %80 = vector.multi_reduction <add>, %79, %cst_25 [1] : vector<2x128xi32> to vector<2xi32>
    %81 = vector.shape_cast %80 : vector<2xi32> to vector<2x1xi32>
    %c7_i32 = arith.constant 7 : i32
    %82 = vector.broadcast %c7_i32 : i32 to vector<2x1xi32>
    %83 = arith.muli %82, %81 : vector<2x1xi32>
    %c127_i32 = arith.constant 127 : i32
    %84 = vector.broadcast %c127_i32 : i32 to vector<2x1xi32>
    %85 = arith.minsi %83, %84 : vector<2x1xi32>
    %86 = arith.sitofp %85 : vector<2x1xi32> to vector<2x1xf32>
    %87 = vector.broadcast %86 : vector<2x1xf32> to vector<2x128xf32>
    %88 = arith.cmpf olt, %78, %87 : vector<2x128xf32>
    %89 = arith.ori %2, %88 : vector<2x128xi1>
    %cst_26 = arith.constant 0.000000e+00 : f32
    %90 = vector.broadcast %cst_26 : f32 to vector<2x128xf32>
    %91 = arith.select %89, %55, %90 : vector<2x128xi1>, vector<2x128xf32>
    %92 = vector.shape_cast %91 : vector<2x128xf32> to vector<1x2x128xf32>
    %cst_27 = arith.constant dense<0.000000e+00> : vector<1xf32>
    %93 = vector.multi_reduction <add>, %92, %cst_27 [1, 2] : vector<1x2x128xf32> to vector<1xf32>
    %94 = vector.shape_cast %93 : vector<1xf32> to vector<1x1x1xf32>
    %95 = vector.extract %94[0, 0, 0] : f32 from vector<1x1x1xf32>
    %96 = vector.shape_cast %81 : vector<2x1xi32> to vector<1x2x1xi32>
    %cst_28 = arith.constant dense<0> : vector<1xi32>
    %97 = vector.multi_reduction <add>, %96, %cst_28 [1, 2] : vector<1x2x1xi32> to vector<1xi32>
    %98 = vector.shape_cast %97 : vector<1xi32> to vector<1x1x1xi32>
    %99 = vector.extract %98[0, 0, 0] : i32 from vector<1x1x1xi32>
    %100 = arith.sitofp %99 : i32 to f32
    %cst_29 = arith.constant 1.000000e+00 : f32
    %101 = arith.maximumf %100, %cst_29 : f32
    %102 = arith.divf %95, %101 : f32
    %c1 = arith.constant 1 : index
    %103 = memref.load %arg4[%c1] : memref<4xf32, #tpu.memory_space<smem>>
    memref.store %102, %arg4[%c1] : memref<4xf32, #tpu.memory_space<smem>>
    return
  }
}

</mosaic_0001>

<llo_original>
// kernel: tpu_custom_call.1
$region0: #{tpu_custom_call.1}
  #allocation0 [shape = 'u32[]', space=smem, size = 0x4, offset = 0x4, fixed_abs, tag = 'smem constant byte address 0x4 - core index']
  #allocation1 [shape = 'u32[72,128]{1,0:T(1,128)}', space=vmem, size = 0x9000, scoped, tag = 'internal scratch']
  %s0 = inlined_call_operand.hbm [shape: s32[2,128], index: 0, kind: input, shape index: {}]
  %s1 = inlined_call_operand.hbm [shape: f32[2,4,128], index: 1, kind: input, shape index: {}]
  %s2 = inlined_call_operand.hbm [shape: f32[2,4,128], index: 2, kind: input, shape index: {}]
  %s3 = inlined_call_operand.hbm [shape: f32[2,2,128], index: 3, kind: input, shape index: {}]
  %s4 = inlined_call_operand.hbm [shape: f32[4], index: 4, kind: output, shape index: {}]
  %s5 = sld [smem:[#allocation0]]
  $region42: #{tpu_custom_call.1} parent=0
    _
  %s7 = ssub.s32 1, %s5
  %s8 = scalar_select 0, %s7, %s5
  $region1: #{tpu_custom_call.1} parent=0
    #allocation2 [shape = 'u8[1024]{0}', space=vmem, size = 0x400, scoped, tag = 'input window, operand 0, single buffered']
    #allocation3 [shape = 's32[1]{0}', space=sflag, size = 0x4, scoped, tag = 'scoped memory for tpu_custom_call.1']
    #allocation4 [shape = 's32[1]{0}', space=sflag, size = 0x4, scoped, tag = 'scoped memory for tpu_custom_call.1']
    #allocation5 [shape = 'u8[4096]{0}', space=vmem, size = 0x1000, scoped, tag = 'input window, operand 1, single buffered']
    #allocation6 [shape = 's32[1]{0}', space=sflag, size = 0x4, scoped, tag = 'scoped memory for tpu_custom_call.1']
    #allocation7 [shape = 'u8[4096]{0}', space=vmem, size = 0x1000, scoped, tag = 'input window, operand 2, single buffered']
    #allocation8 [shape = 'u8[2048]{0}', space=vmem, size = 0x800, scoped, tag = 'input window, operand 3, single buffered']
    #allocation9 [shape = 's32[1]{0}', space=sflag, size = 0x4, scoped, tag = 'scoped memory for tpu_custom_call.1']
    #allocation10 [shape = 'u8[512]{0}', space=smem, size = 0x200, scoped, tag = 'output window, operand 0, single buffered']
    %9 = vsyncpa [#allocation3], 0
    %10 = vsyncpa [#allocation6], 0
    %11 = vsyncpa [#allocation9], 0
    %12 = vsyncpa [#allocation4], 0
    // Predicated region
    $region2: #{tpu_custom_call.1} parent=1 // pred_check
      _
    $region3: #{tpu_custom_call.1} parent=1 // pred_check_branch
      %14 = sbr.rel (0) target = $region5
    $region4: #{tpu_custom_call.1} parent=1 // pred_region
      %16 = vsyncadd [#allocation3], 0
      %s18 = sshll.u32 %s0, 4
      %s19 = int_to_ptr.hbm [resolvable:$true] %s18
      %s20 = sshll.u32 [#allocation2], 4
      %s21 = int_to_ptr.vmem [resolvable:$true] %s20
      %23 = dma.hbm_to_vmem [thread:$0]  %s19, 32, %s21, [#allocation3]
    $region5: #{tpu_custom_call.1} parent=1 // pred_fallthru
      _
    // Predicated region
    $region6: #{tpu_custom_call.1} parent=1 // pred_check
      _
    $region7: #{tpu_custom_call.1} parent=1 // pred_check_branch
      %25 = sbr.rel (0) target = $region9
    $region8: #{tpu_custom_call.1} parent=1 // pred_region
      %27 = vsyncadd [#allocation6], 0
      %s28 = sshll.u32 %s1, 4
      %s29 = int_to_ptr.hbm [resolvable:$true] %s28
      %s30 = sshll.u32 [#allocation5], 4
      %s31 = int_to_ptr.vmem [resolvable:$true] %s30
      %36 = dma.hbm_to_vmem [thread:$0]  %s29, 128, %s31, [#allocation6], 64, 64, 4
    $region9: #{tpu_custom_call.1} parent=1 // pred_fallthru
      _
    // Predicated region
    $region10: #{tpu_custom_call.1} parent=1 // pred_check
      _
    $region11: #{tpu_custom_call.1} parent=1 // pred_check_branch
      %38 = sbr.rel (0) target = $region13
    $region12: #{tpu_custom_call.1} parent=1 // pred_region
      %40 = vsyncadd [#allocation6], 0
      %s41 = sshll.u32 %s2, 4
      %s42 = int_to_ptr.hbm [resolvable:$true] %s41
      %s43 = sshll.u32 [#allocation7], 4
      %s44 = int_to_ptr.vmem [resolvable:$true] %s43
      %49 = dma.hbm_to_vmem [thread:$0]  %s42, 128, %s44, [#allocation6], 64, 64, 4
    $region13: #{tpu_custom_call.1} parent=1 // pred_fallthru
      _
    // Predicated region
    $region14: #{tpu_custom_call.1} parent=1 // pred_check
      _
    $region15: #{tpu_custom_call.1} parent=1 // pred_check_branch
      %51 = sbr.rel (0) target = $region17
    $region16: #{tpu_custom_call.1} parent=1 // pred_region
      %53 = vsyncadd [#allocation9], 0
      %s54 = sshll.u32 %s3, 4
      %s55 = int_to_ptr.hbm [resolvable:$true] %s54
      %s56 = sshll.u32 [#allocation8], 4
      %s57 = int_to_ptr.vmem [resolvable:$true] %s56
      %62 = dma.hbm_to_vmem [thread:$0]  %s55, 64, %s57, [#allocation9], 32, 32, 2
    $region17: #{tpu_custom_call.1} parent=1 // pred_fallthru
      _
    // Predicated region
    $region18: #{tpu_custom_call.1} parent=1 // pred_check
      _
    $region19: #{tpu_custom_call.1} parent=1 // pred_check_branch
      %64 = sbr.rel (0) target = $region21
    $region20: #{tpu_custom_call.1} parent=1 // pred_region
      %66 = dma.done [#allocation3], 32
    $region21: #{tpu_custom_call.1} parent=1 // pred_fallthru
      _
    // Predicated region
    $region22: #{tpu_custom_call.1} parent=1 // pred_check
      _
    $region23: #{tpu_custom_call.1} parent=1 // pred_check_branch
      %68 = sbr.rel (0) target = $region25
    $region24: #{tpu_custom_call.1} parent=1 // pred_region
      %70 = dma.done [#allocation6], 128
    $region25: #{tpu_custom_call.1} parent=1 // pred_fallthru
      _
    // Predicated region
    $region26: #{tpu_custom_call.1} parent=1 // pred_check
      _
    $region27: #{tpu_custom_call.1} parent=1 // pred_check_branch
      %72 = sbr.rel (0) target = $region29
    $region28: #{tpu_custom_call.1} parent=1 // pred_region
      %74 = dma.done [#allocation6], 128
    $region29: #{tpu_custom_call.1} parent=1 // pred_fallthru
      _
    // Predicated region
    $region30: #{tpu_custom_call.1} parent=1 // pred_check
      _
    $region31: #{tpu_custom_call.1} parent=1 // pred_check_branch
      %76 = sbr.rel (0) target = $region33
    $region32: #{tpu_custom_call.1} parent=1 // pred_region
      %78 = dma.done [#allocation9], 64
    $region33: #{tpu_custom_call.1} parent=1 // pred_fallthru
      _
    %v79 = vld [vmem:[#allocation2] sm:$0x3]
    %vm80 = vcmp.ne.s32.totalorder %v79, 0
    %v81 = vsel %vm80, 1, 0
    %v82 = vrot.slane %v81, 1
    %vm83 = vcmp.ne.s32.totalorder %v82, 0
    %v84 = vld [vmem:[#allocation5] sm:$0xf]
    %v85 = vld [vmem:[#allocation5 + $0x4] sm:$0xf]
    %v86 = vld [vmem:[#allocation7] sm:$0xf]
    %v87 = vld [vmem:[#allocation7 + $0x4] sm:$0xf]
    %vm88 = vcmp.ne.f32.partialorder %v86, %v86
    %vm89 = vcmp.ne.f32.partialorder %v87, %v87
    %vm90 = vmxor %vm88, 1
    %vm91 = vmxor %vm89, 1
    %v92 = vsel %vm83, 1, 0
    %v93 = vperm.slane %v81, 0
    %v94 = vperm.slane %v92, 0
    %vm95 = vcmp.eq.s32.totalorder %v93, 1
    %vm96 = vcmp.eq.s32.totalorder %v94, 1
    %vm97 = vmand %vm95, %vm90
    %vm98 = vmand %vm96, %vm91
    %v99 = vsel %vm97, %v86, 0.0
    %v100 = vsel %vm98, %v87, 0.0
    %v101 = vsel %vm97, %v84, 0.0
    %v102 = vsel %vm98, %v85, 0.0
    %v103 = vsub.f32 %v101, %v99
    %v104 = vsub.f32 %v102, %v100
    %v105 = vand.u32 2147483647, %v103
    %v106 = vand.u32 2147483647, %v104
    %vm107 = vcmp.lt.f32.partialorder %v105, 1.0
    %vm108 = vcmp.lt.f32.partialorder %v106, 1.0
    %v109 = vmul.f32 %v105, 0.5
    %v110 = vmul.f32 %v106, 0.5
    %v111 = vmul.f32 %v109, %v105
    %v112 = vmul.f32 %v110, %v106
    %v113 = vsub.f32 %v105, 0.5
    %v114 = vsub.f32 %v106, 0.5
    %v115 = vsel %vm107, %v111, %v113
    %v116 = vsel %vm108, %v112, %v114
    %v117 = vsel %vm97, %v115, 0.0
    %v118 = vsel %vm98, %v116, 0.0
    %vm119 = vcmask 1043456
    %v120 = vsel %vm119, %v117, 0.0
    %v121 = vsel %vm119, %v118, 0.0
    %v122 = vadd.f32 %v120, %v121
    %123 = vadd.xlane.f32.xlu0 %v122
    %v124 = vpop.xlane.xlu0 %123
    %v125 = vrot.slane %v124, 4
    %v126 = vadd.f32 %v124, %v125
    %v127 = vrot.slane %v126, 2
    %v128 = vadd.f32 %v126, %v127
    %v129 = vrot.slane %v128, 1
    %v130 = vadd.f32 %v128, %v129
    %s131 = vtos %v130
    %v132 = vsel %vm97, 1, 0
    %v133 = vsel %vm98, 1, 0
    %v134 = vcvt.s32.f32 %v132
    %v135 = vcvt.s32.f32 %v133
    %v136 = vsel %vm119, %v134, 0.0
    %v137 = vsel %vm119, %v135, 0.0
    %v138 = vadd.f32 %v136, %v137
    %139 = vadd.xlane.f32.xlu0 %v138
    %v140 = vpop.xlane.xlu0 %139
    %v141 = vrot.slane %v140, 4
    %v142 = vadd.f32 %v140, %v141
    %v143 = vrot.slane %v142, 2
    %v144 = vadd.f32 %v142, %v143
    %v145 = vrot.slane %v144, 1
    %v146 = vadd.f32 %v144, %v145
    %s147 = vtos %v146
    %s148 = smax.f32 %s147, 1.0
    %v149 = vstv %s148
    %v150 = vrcp.pop %v149
    %v151 = vmul.f32 %v149, %v150
    %v152 = vsub.f32 1.0, %v151
    %v153 = vmul.f32 %v150, %v152
    %v154 = vadd.f32 %v150, %v153
    %vm155 = vweird.f32 %v149
    %vm156 = vweird.f32 %v150
    %vm157 = vmor %vm155, %vm156
    %v158 = vsel %vm157, %v150, %v154
    %v159 = vand.u32 2147483647, %v149
    %vm160 = vcmp.eq.f32.partialorder %v159, 8.507059e+37
    %v161 = vand.u32 %v149, 2147483648
    %v162 = vor.u32 1.1754944e-38, %v161
    %v163 = vsel %vm160, %v162, %v158
    %s164 = vtos %v163
    %s165 = smul.f32 %s131, %s164
    %s166 = scalar_lea.smem [#allocation10], 0
    %167 = sst [smem:[%s166]] %s165
    %s168 = scalar_lea.smem [#allocation10], 2
    %169 = sst [smem:[%s168]] 0.0
    %s170 = scalar_lea.smem [#allocation10], 3
    %171 = sst [smem:[%s170]] 0.0
    %v172 = vld [vmem:[#allocation8] sm:$0x3]
    %v173 = vld [vmem:[#allocation8 + $0x2] sm:$0x3]
    %v176 = vrot.slane %v172, 1
    %v177 = vrot.slane %v173, 1
    %v180 = vmax.f32 %v172, %v176
    %v181 = vmax.f32 %v173, %v177
    %v182 = vsub.f32 %v172, %v180
    %v183 = vsub.f32 %v173, %v181
    %v184 = vmul.f32 %v182, 1.442695
    %v185 = vpow.pop %v184
    %v186 = vmul.f32 %v183, 1.442695
    %v187 = vpow.pop %v186
    %v190 = vrot.slane %v180, 7
    %v191 = vrot.slane %v181, 7
    %v194 = vsub.f32 %v172, %v190
    %v195 = vsub.f32 %v173, %v191
    %v196 = vmul.f32 %v194, 1.442695
    %v197 = vpow.pop %v196
    %v198 = vmul.f32 %v195, 1.442695
    %v199 = vpow.pop %v198
    %v202 = vrot.slane %v197, 1
    %v203 = vrot.slane %v199, 1
    %v206 = vadd.f32 %v185, %v202
    %v207 = vadd.f32 %v187, %v203
    %v208 = vlog2.pop %v206
    %v209 = vmul.f32 %v208, 0.6931472
    %v210 = vlog2.pop %v207
    %v211 = vmul.f32 %v210, 0.6931472
    %v212 = vadd.f32 %v180, %v209
    %v213 = vadd.f32 %v181, %v211
    %vm214 = vcmask 1041409
    %v215 = vsel %vm214, %v173, %v176
    %v217 = vrot.slane %v173, 7
    %v218 = vsel %vm214, %v217, %v172
    %v220 = vsel %vm80, %v215, %v218
    %v222 = vrot.slane %v220, 1
    %v225 = vsub.f32 %v212, %v220
    %v226 = vsub.f32 %v213, %v222
    %v229 = vrot.slane %v226, 7
    %v230 = vsel %vm214, %v229, %v225
    %v232 = vsel %vm80, 0.0, %v230
    %v233 = vlaneseq
    %v234 = vshrl.u32 %v233, 7
    %v235 = vadd.s32 %v234, 8
    %v236 = vadd.s32 %v234, 16
    %v237 = vadd.s32 %v234, 24
    %v238 = vadd.s32 %v234, 32
    %v239 = vadd.s32 %v234, 40
    %v240 = vadd.s32 %v234, 48
    %v241 = vadd.s32 %v234, 56
    %v242 = vadd.s32 %v234, 64
    %v243 = vadd.s32 %v234, 72
    %v244 = vadd.s32 %v234, 80
    %v245 = vadd.s32 %v234, 88
    %v246 = vadd.s32 %v234, 96
    %v247 = vadd.s32 %v234, 104
    %v248 = vadd.s32 %v234, 112
    %v249 = vadd.s32 %v234, 120
    %v250 = vlaneseq
    %v251 = vand.u32 %v250, 127
    %vm252 = vcmp.lt.s32.totalorder %v234, %v251
    %vm253 = vcmp.lt.s32.totalorder %v235, %v251
    %vm254 = vcmp.lt.s32.totalorder %v236, %v251
    %vm255 = vcmp.lt.s32.totalorder %v237, %v251
    %vm256 = vcmp.lt.s32.totalorder %v238, %v251
    %vm257 = vcmp.lt.s32.totalorder %v239, %v251
    %vm258 = vcmp.lt.s32.totalorder %v240, %v251
    %vm259 = vcmp.lt.s32.totalorder %v241, %v251
    %vm260 = vcmp.lt.s32.totalorder %v242, %v251
    %vm261 = vcmp.lt.s32.totalorder %v243, %v251
    %vm262 = vcmp.lt.s32.totalorder %v244, %v251
    %vm263 = vcmp.lt.s32.totalorder %v245, %v251
    %vm264 = vcmp.lt.s32.totalorder %v246, %v251
    %vm265 = vcmp.lt.s32.totalorder %v247, %v251
    %vm266 = vcmp.lt.s32.totalorder %v248, %v251
    %vm267 = vcmp.lt.s32.totalorder %v249, %v251
    %v268 = vperm.slane %v232, 0
    %v269 = vlaneseq
    %v270 = vshrl.u32 %v269, 7
    %272 = vset.pattern.permute.xlu0 %v270
    %273 = vperm.xlu0 %272, %v268
    %v274 = vpop.permute.xlu0 %273
    %v275 = vlaneseq
    %v276 = vshrl.u32 %v275, 7
    %v277 = vadd.s32 %v276, 8
    %278 = vset.pattern.permute.xlu0 %v277
    %279 = vperm.xlu0 %278, %v268
    %v280 = vpop.permute.xlu0 %279
    %v281 = vlaneseq
    %v282 = vshrl.u32 %v281, 7
    %v283 = vadd.s32 %v282, 16
    %284 = vset.pattern.permute.xlu0 %v283
    %285 = vperm.xlu0 %284, %v268
    %v286 = vpop.permute.xlu0 %285
    %v287 = vlaneseq
    %v288 = vshrl.u32 %v287, 7
    %v289 = vadd.s32 %v288, 24
    %290 = vset.pattern.permute.xlu0 %v289
    %291 = vperm.xlu0 %290, %v268
    %v292 = vpop.permute.xlu0 %291
    %v293 = vlaneseq
    %v294 = vshrl.u32 %v293, 7
    %v295 = vadd.s32 %v294, 32
    %296 = vset.pattern.permute.xlu0 %v295
    %297 = vperm.xlu0 %296, %v268
    %v298 = vpop.permute.xlu0 %297
    %v299 = vlaneseq
    %v300 = vshrl.u32 %v299, 7
    %v301 = vadd.s32 %v300, 40
    %302 = vset.pattern.permute.xlu0 %v301
    %303 = vperm.xlu0 %302, %v268
    %v304 = vpop.permute.xlu0 %303
    %v305 = vlaneseq
    %v306 = vshrl.u32 %v305, 7
    %v307 = vadd.s32 %v306, 48
    %308 = vset.pattern.permute.xlu0 %v307
    %309 = vperm.xlu0 %308, %v268
    %v310 = vpop.permute.xlu0 %309
    %v311 = vlaneseq
    %v312 = vshrl.u32 %v311, 7
    %v313 = vadd.s32 %v312, 56
    %314 = vset.pattern.permute.xlu0 %v313
    %315 = vperm.xlu0 %314, %v268
    %v316 = vpop.permute.xlu0 %315
    %v317 = vlaneseq
    %v318 = vshrl.u32 %v317, 7
    %v319 = vadd.s32 %v318, 64
    %320 = vset.pattern.permute.xlu0 %v319
    %321 = vperm.xlu0 %320, %v268
    %v322 = vpop.permute.xlu0 %321
    %v323 = vlaneseq
    %v324 = vshrl.u32 %v323, 7
    %v325 = vadd.s32 %v324, 72
    %326 = vset.pattern.permute.xlu0 %v325
    %327 = vperm.xlu0 %326, %v268
    %v328 = vpop.permute.xlu0 %327
    %v329 = vlaneseq
    %v330 = vshrl.u32 %v329, 7
    %v331 = vadd.s32 %v330, 80
    %332 = vset.pattern.permute.xlu0 %v331
    %333 = vperm.xlu0 %332, %v268
    %v334 = vpop.permute.xlu0 %333
    %v335 = vlaneseq
    %v336 = vshrl.u32 %v335, 7
    %v337 = vadd.s32 %v336, 88
    %338 = vset.pattern.permute.xlu0 %v337
    %339 = vperm.xlu0 %338, %v268
    %v340 = vpop.permute.xlu0 %339
    %v341 = vlaneseq
    %v342 = vshrl.u32 %v341, 7
    %v343 = vadd.s32 %v342, 96
    %344 = vset.pattern.permute.xlu0 %v343
    %345 = vperm.xlu0 %344, %v268
    %v346 = vpop.permute.xlu0 %345
    %v347 = vlaneseq
    %v348 = vshrl.u32 %v347, 7
    %v349 = vadd.s32 %v348, 104
    %350 = vset.pattern.permute.xlu0 %v349
    %351 = vperm.xlu0 %350, %v268
    %v352 = vpop.permute.xlu0 %351
    %v353 = vlaneseq
    %v354 = vshrl.u32 %v353, 7
    %v355 = vadd.s32 %v354, 112
    %356 = vset.pattern.permute.xlu0 %v355
    %357 = vperm.xlu0 %356, %v268
    %v358 = vpop.permute.xlu0 %357
    %v359 = vlaneseq
    %v360 = vshrl.u32 %v359, 7
    %v361 = vadd.s32 %v360, 120
    %362 = vset.pattern.permute.xlu0 %v361
    %363 = vperm.xlu0 %362, %v268
    %v364 = vpop.permute.xlu0 %363
    %v365 = vperm.slane %v232, 1
    %v366 = vlaneseq
    %v367 = vshrl.u32 %v366, 7
    %369 = vset.pattern.permute.xlu0 %v367
    %370 = vperm.xlu0 %369, %v365
    %v371 = vpop.permute.xlu0 %370
    %v372 = vlaneseq
    %v373 = vshrl.u32 %v372, 7
    %v374 = vadd.s32 %v373, 8
    %375 = vset.pattern.permute.xlu0 %v374
    %376 = vperm.xlu0 %375, %v365
    %v377 = vpop.permute.xlu0 %376
    %v378 = vlaneseq
    %v379 = vshrl.u32 %v378, 7
    %v380 = vadd.s32 %v379, 16
    %381 = vset.pattern.permute.xlu0 %v380
    %382 = vperm.xlu0 %381, %v365
    %v383 = vpop.permute.xlu0 %382
    %v384 = vlaneseq
    %v385 = vshrl.u32 %v384, 7
    %v386 = vadd.s32 %v385, 24
    %387 = vset.pattern.permute.xlu0 %v386
    %388 = vperm.xlu0 %387, %v365
    %v389 = vpop.permute.xlu0 %388
    %v390 = vlaneseq
    %v391 = vshrl.u32 %v390, 7
    %v392 = vadd.s32 %v391, 32
    %393 = vset.pattern.permute.xlu0 %v392
    %394 = vperm.xlu0 %393, %v365
    %v395 = vpop.permute.xlu0 %394
    %v396 = vlaneseq
    %v397 = vshrl.u32 %v396, 7
    %v398 = vadd.s32 %v397, 40
    %399 = vset.pattern.permute.xlu0 %v398
    %400 = vperm.xlu0 %399, %v365
    %v401 = vpop.permute.xlu0 %400
    %v402 = vlaneseq
    %v403 = vshrl.u32 %v402, 7
    %v404 = vadd.s32 %v403, 48
    %405 = vset.pattern.permute.xlu0 %v404
    %406 = vperm.xlu0 %405, %v365
    %v407 = vpop.permute.xlu0 %406
    %v408 = vlaneseq
    %v409 = vshrl.u32 %v408, 7
    %v410 = vadd.s32 %v409, 56
    %411 = vset.pattern.permute.xlu0 %v410
    %412 = vperm.xlu0 %411, %v365
    %v413 = vpop.permute.xlu0 %412
    %v414 = vlaneseq
    %v415 = vshrl.u32 %v414, 7
    %v416 = vadd.s32 %v415, 64
    %417 = vset.pattern.permute.xlu0 %v416
    %418 = vperm.xlu0 %417, %v365
    %v419 = vpop.permute.xlu0 %418
    %v420 = vlaneseq
    %v421 = vshrl.u32 %v420, 7
    %v422 = vadd.s32 %v421, 72
    %423 = vset.pattern.permute.xlu0 %v422
    %424 = vperm.xlu0 %423, %v365
    %v425 = vpop.permute.xlu0 %424
    %v426 = vlaneseq
    %v427 = vshrl.u32 %v426, 7
    %v428 = vadd.s32 %v427, 80
    %429 = vset.pattern.permute.xlu0 %v428
    %430 = vperm.xlu0 %429, %v365
    %v431 = vpop.permute.xlu0 %430
    %v432 = vlaneseq
    %v433 = vshrl.u32 %v432, 7
    %v434 = vadd.s32 %v433, 88
    %435 = vset.pattern.permute.xlu0 %v434
    %436 = vperm.xlu0 %435, %v365
    %v437 = vpop.permute.xlu0 %436
    %v438 = vlaneseq
    %v439 = vshrl.u32 %v438, 7
    %v440 = vadd.s32 %v439, 96
    %441 = vset.pattern.permute.xlu0 %v440
    %442 = vperm.xlu0 %441, %v365
    %v443 = vpop.permute.xlu0 %442
    %v444 = vlaneseq
    %v445 = vshrl.u32 %v444, 7
    %v446 = vadd.s32 %v445, 104
    %447 = vset.pattern.permute.xlu0 %v446
    %448 = vperm.xlu0 %447, %v365
    %v449 = vpop.permute.xlu0 %448
    %v450 = vlaneseq
    %v451 = vshrl.u32 %v450, 7
    %v452 = vadd.s32 %v451, 112
    %453 = vset.pattern.permute.xlu0 %v452
    %454 = vperm.xlu0 %453, %v365
    %v455 = vpop.permute.xlu0 %454
    %v456 = vlaneseq
    %v457 = vshrl.u32 %v456, 7
    %v458 = vadd.s32 %v457, 120
    %459 = vset.pattern.permute.xlu0 %v458
    %460 = vperm.xlu0 %459, %v365
    %v461 = vpop.permute.xlu0 %460
    %v463 = vrot.slane %v232, 1
    %v464 = vperm.slane %v232, 0
    %v465 = vperm.slane %v463, 0
    %vm468 = vcmp.gt.f32.partialorder %v274, %v464
    %vm469 = vcmp.gt.f32.partialorder %v280, %v464
    %vm470 = vcmp.gt.f32.partialorder %v286, %v464
    %vm471 = vcmp.gt.f32.partialorder %v292, %v464
    %vm472 = vcmp.gt.f32.partialorder %v298, %v464
    %vm473 = vcmp.gt.f32.partialorder %v304, %v464
    %vm474 = vcmp.gt.f32.partialorder %v310, %v464
    %vm475 = vcmp.gt.f32.partialorder %v316, %v464
    %vm476 = vcmp.gt.f32.partialorder %v322, %v464
    %vm477 = vcmp.gt.f32.partialorder %v328, %v464
    %vm478 = vcmp.gt.f32.partialorder %v334, %v464
    %vm479 = vcmp.gt.f32.partialorder %v340, %v464
    %vm480 = vcmp.gt.f32.partialorder %v346, %v464
    %vm481 = vcmp.gt.f32.partialorder %v352, %v464
    %vm482 = vcmp.gt.f32.partialorder %v358, %v464
    %vm483 = vcmp.gt.f32.partialorder %v364, %v464
    %vm484 = vcmp.gt.f32.partialorder %v371, %v465
    %vm485 = vcmp.gt.f32.partialorder %v377, %v465
    %vm486 = vcmp.gt.f32.partialorder %v383, %v465
    %vm487 = vcmp.gt.f32.partialorder %v389, %v465
    %vm488 = vcmp.gt.f32.partialorder %v395, %v465
    %vm489 = vcmp.gt.f32.partialorder %v401, %v465
    %vm490 = vcmp.gt.f32.partialorder %v407, %v465
    %vm491 = vcmp.gt.f32.partialorder %v413, %v465
    %vm492 = vcmp.gt.f32.partialorder %v419, %v465
    %vm493 = vcmp.gt.f32.partialorder %v425, %v465
    %vm494 = vcmp.gt.f32.partialorder %v431, %v465
    %vm495 = vcmp.gt.f32.partialorder %v437, %v465
    %vm496 = vcmp.gt.f32.partialorder %v443, %v465
    %vm497 = vcmp.gt.f32.partialorder %v449, %v465
    %vm498 = vcmp.gt.f32.partialorder %v455, %v465
    %vm499 = vcmp.gt.f32.partialorder %v461, %v465
    %vm500 = vcmp.eq.f32.partialorder %v274, %v464
    %vm501 = vcmp.eq.f32.partialorder %v280, %v464
    %vm502 = vcmp.eq.f32.partialorder %v286, %v464
    %vm503 = vcmp.eq.f32.partialorder %v292, %v464
    %vm504 = vcmp.eq.f32.partialorder %v298, %v464
    %vm505 = vcmp.eq.f32.partialorder %v304, %v464
    %vm506 = vcmp.eq.f32.partialorder %v310, %v464
    %vm507 = vcmp.eq.f32.partialorder %v316, %v464
    %vm508 = vcmp.eq.f32.partialorder %v322, %v464
    %vm509 = vcmp.eq.f32.partialorder %v328, %v464
    %vm510 = vcmp.eq.f32.partialorder %v334, %v464
    %vm511 = vcmp.eq.f32.partialorder %v340, %v464
    %vm512 = vcmp.eq.f32.partialorder %v346, %v464
    %vm513 = vcmp.eq.f32.partialorder %v352, %v464
    %vm514 = vcmp.eq.f32.partialorder %v358, %v464
    %vm515 = vcmp.eq.f32.partialorder %v364, %v464
    %vm516 = vcmp.eq.f32.partialorder %v371, %v465
    %vm517 = vcmp.eq.f32.partialorder %v377, %v465
    %vm518 = vcmp.eq.f32.partialorder %v383, %v465
    %vm519 = vcmp.eq.f32.partialorder %v389, %v465
    %vm520 = vcmp.eq.f32.partialorder %v395, %v465
    %vm521 = vcmp.eq.f32.partialorder %v401, %v465
    %vm522 = vcmp.eq.f32.partialorder %v407, %v465
    %vm523 = vcmp.eq.f32.partialorder %v413, %v465
    %vm524 = vcmp.eq.f32.partialorder %v419, %v465
    %vm525 = vcmp.eq.f32.partialorder %v425, %v465
    %vm526 = vcmp.eq.f32.partialorder %v431, %v465
    %vm527 = vcmp.eq.f32.partialorder %v437, %v465
    %vm528 = vcmp.eq.f32.partialorder %v443, %v465
    %vm529 = vcmp.eq.f32.partialorder %v449, %v465
    %vm530 = vcmp.eq.f32.partialorder %v455, %v465
    %vm531 = vcmp.eq.f32.partialorder %v461, %v465
    %v532 = vsel %vm252, 1, 0
    %v533 = vsel %vm253, 1, 0
    %v534 = vsel %vm254, 1, 0
    %v535 = vsel %vm255, 1, 0
    %v536 = vsel %vm256, 1, 0
    %v537 = vsel %vm257, 1, 0
    %v538 = vsel %vm258, 1, 0
    %v539 = vsel %vm259, 1, 0
    %v540 = vsel %vm260, 1, 0
    %v541 = vsel %vm261, 1, 0
    %v542 = vsel %vm262, 1, 0
    %v543 = vsel %vm263, 1, 0
    %v544 = vsel %vm264, 1, 0
    %v545 = vsel %vm265, 1, 0
    %v546 = vsel %vm266, 1, 0
    %v547 = vsel %vm267, 1, 0
    %vm548 = vcmp.eq.s32.totalorder %v532, 1
    %vm549 = vcmp.eq.s32.totalorder %v533, 1
    %vm550 = vcmp.eq.s32.totalorder %v534, 1
    %vm551 = vcmp.eq.s32.totalorder %v535, 1
    %vm552 = vcmp.eq.s32.totalorder %v536, 1
    %vm553 = vcmp.eq.s32.totalorder %v537, 1
    %vm554 = vcmp.eq.s32.totalorder %v538, 1
    %vm555 = vcmp.eq.s32.totalorder %v539, 1
    %vm556 = vcmp.eq.s32.totalorder %v540, 1
    %vm557 = vcmp.eq.s32.totalorder %v541, 1
    %vm558 = vcmp.eq.s32.totalorder %v542, 1
    %vm559 = vcmp.eq.s32.totalorder %v543, 1
    %vm560 = vcmp.eq.s32.totalorder %v544, 1
    %vm561 = vcmp.eq.s32.totalorder %v545, 1
    %vm562 = vcmp.eq.s32.totalorder %v546, 1
    %vm563 = vcmp.eq.s32.totalorder %v547, 1
    %vm564 = vmand %vm500, %vm548
    %vm565 = vmand %vm501, %vm549
    %vm566 = vmand %vm502, %vm550
    %vm567 = vmand %vm503, %vm551
    %vm568 = vmand %vm504, %vm552
    %vm569 = vmand %vm505, %vm553
    %vm570 = vmand %vm506, %vm554
    %vm571 = vmand %vm507, %vm555
    %vm572 = vmand %vm508, %vm556
    %vm573 = vmand %vm509, %vm557
    %vm574 = vmand %vm510, %vm558
    %vm575 = vmand %vm511, %vm559
    %vm576 = vmand %vm512, %vm560
    %vm577 = vmand %vm513, %vm561
    %vm578 = vmand %vm514, %vm562
    %vm579 = vmand %vm515, %vm563
    %vm580 = vmand %vm516, %vm548
    %vm581 = vmand %vm517, %vm549
    %vm582 = vmand %vm518, %vm550
    %vm583 = vmand %vm519, %vm551
    %vm584 = vmand %vm520, %vm552
    %vm585 = vmand %vm521, %vm553
    %vm586 = vmand %vm522, %vm554
    %vm587 = vmand %vm523, %vm555
    %vm588 = vmand %vm524, %vm556
    %vm589 = vmand %vm525, %vm557
    %vm590 = vmand %vm526, %vm558
    %vm591 = vmand %vm527, %vm559
    %vm592 = vmand %vm528, %vm560
    %vm593 = vmand %vm529, %vm561
    %vm594 = vmand %vm530, %vm562
    %vm595 = vmand %vm531, %vm563
    %vm596 = vmor %vm468, %vm564
    %vm597 = vmor %vm469, %vm565
    %vm598 = vmor %vm470, %vm566
    %vm599 = vmor %vm471, %vm567
    %vm600 = vmor %vm472, %vm568
    %vm601 = vmor %vm473, %vm569
    %vm602 = vmor %vm474, %vm570
    %vm603 = vmor %vm475, %vm571
    %vm604 = vmor %vm476, %vm572
    %vm605 = vmor %vm477, %vm573
    %vm606 = vmor %vm478, %vm574
    %vm607 = vmor %vm479, %vm575
    %vm608 = vmor %vm480, %vm576
    %vm609 = vmor %vm481, %vm577
    %vm610 = vmor %vm482, %vm578
    %vm611 = vmor %vm483, %vm579
    %vm612 = vmor %vm484, %vm580
    %vm613 = vmor %vm485, %vm581
    %vm614 = vmor %vm486, %vm582
    %vm615 = vmor %vm487, %vm583
    %vm616 = vmor %vm488, %vm584
    %vm617 = vmor %vm489, %vm585
    %vm618 = vmor %vm490, %vm586
    %vm619 = vmor %vm491, %vm587
    %vm620 = vmor %vm492, %vm588
    %vm621 = vmor %vm493, %vm589
    %vm622 = vmor %vm494, %vm590
    %vm623 = vmor %vm495, %vm591
    %vm624 = vmor %vm496, %vm592
    %vm625 = vmor %vm497, %vm593
    %vm626 = vmor %vm498, %vm594
    %vm627 = vmor %vm499, %vm595
    %v628 = vsel %vm596, 1, 0
    %v629 = vsel %vm597, 1, 0
    %v630 = vsel %vm598, 1, 0
    %v631 = vsel %vm599, 1, 0
    %v632 = vsel %vm600, 1, 0
    %v633 = vsel %vm601, 1, 0
    %v634 = vsel %vm602, 1, 0
    %v635 = vsel %vm603, 1, 0
    %v636 = vsel %vm604, 1, 0
    %v637 = vsel %vm605, 1, 0
    %v638 = vsel %vm606, 1, 0
    %v639 = vsel %vm607, 1, 0
    %v640 = vsel %vm608, 1, 0
    %v641 = vsel %vm609, 1, 0
    %v642 = vsel %vm610, 1, 0
    %v643 = vsel %vm611, 1, 0
    %v644 = vsel %vm612, 1, 0
    %v645 = vsel %vm613, 1, 0
    %v646 = vsel %vm614, 1, 0
    %v647 = vsel %vm615, 1, 0
    %v648 = vsel %vm616, 1, 0
    %v649 = vsel %vm617, 1, 0
    %v650 = vsel %vm618, 1, 0
    %v651 = vsel %vm619, 1, 0
    %v652 = vsel %vm620, 1, 0
    %v653 = vsel %vm621, 1, 0
    %v654 = vsel %vm622, 1, 0
    %v655 = vsel %vm623, 1, 0
    %v656 = vsel %vm624, 1, 0
    %v657 = vsel %vm625, 1, 0
    %v658 = vsel %vm626, 1, 0
    %v659 = vsel %vm627, 1, 0
    %v660 = vcvt.s32.f32 %v628
    %v661 = vcvt.s32.f32 %v629
    %v662 = vcvt.s32.f32 %v630
    %v663 = vcvt.s32.f32 %v631
    %v664 = vcvt.s32.f32 %v632
    %v665 = vcvt.s32.f32 %v633
    %v666 = vcvt.s32.f32 %v634
    %v667 = vcvt.s32.f32 %v635
    %v668 = vcvt.s32.f32 %v636
    %v669 = vcvt.s32.f32 %v637
    %v670 = vcvt.s32.f32 %v638
    %v671 = vcvt.s32.f32 %v639
    %v672 = vcvt.s32.f32 %v640
    %v673 = vcvt.s32.f32 %v641
    %v674 = vcvt.s32.f32 %v642
    %v675 = vcvt.s32.f32 %v643
    %v676 = vcvt.s32.f32 %v644
    %v677 = vcvt.s32.f32 %v645
    %v678 = vcvt.s32.f32 %v646
    %v679 = vcvt.s32.f32 %v647
    %v680 = vcvt.s32.f32 %v648
    %v681 = vcvt.s32.f32 %v649
    %v682 = vcvt.s32.f32 %v650
    %v683 = vcvt.s32.f32 %v651
    %v684 = vcvt.s32.f32 %v652
    %v685 = vcvt.s32.f32 %v653
    %v686 = vcvt.s32.f32 %v654
    %v687 = vcvt.s32.f32 %v655
    %v688 = vcvt.s32.f32 %v656
    %v689 = vcvt.s32.f32 %v657
    %v690 = vcvt.s32.f32 %v658
    %v691 = vcvt.s32.f32 %v659
    %692 = vmatpush.msra.mxu0 %v675
    %693 = vmatpush.msra.mxu0 %v674
    %694 = vmatpush.msra.mxu0 %v673
    %695 = vmatpush.msra.mxu0 %v672
    %696 = vmatpush.msra.mxu0 %v671
    %697 = vmatpush.msra.mxu0 %v670
    %698 = vmatpush.msra.mxu0 %v669
    %699 = vmatpush.msra.mxu0 %v668
    %700 = vmatpush.msra.mxu0 %v667
    %701 = vmatpush.msra.mxu0 %v666
    %702 = vmatpush.msra.mxu0 %v665
    %703 = vmatpush.msra.mxu0 %v664
    %704 = vmatpush.msra.mxu0 %v663
    %705 = vmatpush.msra.mxu0 %v662
    %706 = vmatpush.msra.mxu0 %v661
    %707 = vmatpush.msra.mxu0 %v660
    %708 = vmatmul.f32.gmra.mxu0 1.0
    %v709 = vpop.f32.mrf.mxu0
    %v710 = vadd.f32 0.0, %v709
    %711 = vdwg.mxu0
    %712 = vmatpush.msra.mxu0 %v691
    %713 = vmatpush.msra.mxu0 %v690
    %714 = vmatpush.msra.mxu0 %v689
    %715 = vmatpush.msra.mxu0 %v688
    %716 = vmatpush.msra.mxu0 %v687
    %717 = vmatpush.msra.mxu0 %v686
    %718 = vmatpush.msra.mxu0 %v685
    %719 = vmatpush.msra.mxu0 %v684
    %720 = vmatpush.msra.mxu0 %v683
    %721 = vmatpush.msra.mxu0 %v682
    %722 = vmatpush.msra.mxu0 %v681
    %723 = vmatpush.msra.mxu0 %v680
    %724 = vmatpush.msra.mxu0 %v679
    %725 = vmatpush.msra.mxu0 %v678
    %726 = vmatpush.msra.mxu0 %v677
    %727 = vmatpush.msra.mxu0 %v676
    %728 = vmatmul.f32.gmra.mxu0 1.0
    %v729 = vpop.f32.mrf.mxu0
    %v730 = vadd.f32 0.0, %v729
    %731 = vdwg.mxu0
    %vm732 = vcmask 1041408
    %v733 = vsel %vm732, %v81, 0
    %v734 = vand.u32 %v733, 65535
    %v735 = vshrl.u32 %v733, 16
    %v736 = vcvt.s32.f32 %v734
    %v737 = vcvt.s32.f32 %v735
    %738 = vadd.xlane.f32.xlu0 %v736
    %v739 = vpop.xlane.xlu0 %738
    %740 = vadd.xlane.f32.xlu0 %v737
    %v741 = vpop.xlane.xlu0 %740
    %v742 = vcvt.f32.s32 %v739
    %v743 = vcvt.f32.s32 %v741
    %v744 = vshll.u32 %v743, 16
    %v745 = vadd.s32 %v744, %v742
    %v746 = vmul.u32 %v745, 7
    %vm747 = vcmp.lt.s32.totalorder %v746, 127
    %v748 = vsel %vm747, %v746, 127
    %v749 = vcvt.s32.f32 %v748
    %v751 = vrot.slane %v749, 1
    %vm754 = vcmp.lt.f32.partialorder %v710, %v749
    %vm755 = vcmp.lt.f32.partialorder %v730, %v751
    %v756 = vsel %vm754, 1, 0
    %v757 = vsel %vm755, 1, 0
    %v758 = vrot.slane %v757, 7
    %v759 = vsel %vm214, %v758, %v756
    %vm760 = vcmp.ne.s32.totalorder %v759, 0
    %vm761 = vmor %vm80, %vm760
    %v762 = vsel %vm761, %v230, 0.0
    %v763 = vsel %vm732, %v762, 0.0
    %764 = vadd.xlane.f32.xlu0 %v763
    %v765 = vpop.xlane.xlu0 %764
    %v766 = vrot.slane %v765, 4
    %v767 = vadd.f32 %v765, %v766
    %v768 = vrot.slane %v767, 2
    %v769 = vadd.f32 %v767, %v768
    %v770 = vrot.slane %v769, 1
    %v771 = vadd.f32 %v769, %v770
    %s772 = vtos %v771
    %v773 = vsel %vm732, %v745, 0
    %v774 = vrot.slane %v773, 4
    %v775 = vadd.s32 %v773, %v774
    %v776 = vrot.slane %v775, 2
    %v777 = vadd.s32 %v775, %v776
    %v778 = vrot.slane %v777, 1
    %v779 = vadd.s32 %v777, %v778
    %s780 = vtos %v779
    %s781 = scvt.s32.f32 %s780
    %s782 = smax.f32 %s781, 1.0
    %v783 = vstv %s782
    %v784 = vrcp.pop %v783
    %v785 = vmul.f32 %v783, %v784
    %v786 = vsub.f32 1.0, %v785
    %v787 = vmul.f32 %v784, %v786
    %v788 = vadd.f32 %v784, %v787
    %vm789 = vweird.f32 %v783
    %vm790 = vweird.f32 %v784
    %vm791 = vmor %vm789, %vm790
    %v792 = vsel %vm791, %v784, %v788
    %v793 = vand.u32 2147483647, %v783
    %vm794 = vcmp.eq.f32.partialorder %v793, 8.507059e+37
    %v795 = vand.u32 %v783, 2147483648
    %v796 = vor.u32 1.1754944e-38, %v795
    %v797 = vsel %vm794, %v796, %v792
    %s798 = vtos %v797
    %s799 = smul.f32 %s772, %s798
    %s800 = scalar_lea.smem [#allocation10], 1
    %801 = sst [smem:[%s800]] %s799
    // Predicated region
    $region34: #{tpu_custom_call.1} parent=1 // pred_check
      _
    $region35: #{tpu_custom_call.1} parent=1 // pred_check_branch
      %803 = sbr.rel (0) target = $region37
    $region36: #{tpu_custom_call.1} parent=1 // pred_region
      %805 = vsyncadd [#allocation4], 0
      %s807 = sshll.u32 %s4, 4
      %s808 = int_to_ptr.hbm [resolvable:$true] %s807
      %810 = dma.smem_to_hbm [#allocation10], 16, %s808, [#allocation4]
    $region37: #{tpu_custom_call.1} parent=1 // pred_fallthru
      _
    // Predicated region
    $region38: #{tpu_custom_call.1} parent=1 // pred_check
      _
    $region39: #{tpu_custom_call.1} parent=1 // pred_check_branch
      %812 = sbr.rel (0) target = $region41
    $region40: #{tpu_custom_call.1} parent=1 // pred_region
      %814 = dma.done [#allocation4], 16
    $region41: #{tpu_custom_call.1} parent=1 // pred_fallthru
      _
    %815 = sfence
    %816 = vsyncpa [#allocation3], 1
    %817 = vsyncpa [#allocation6], 1
    %818 = vsyncpa [#allocation9], 1
    %819 = vsyncpa [#allocation4], 1

</llo_original>
